<compile_context>
chip_gen: v6e
topology: v6e:2x2x1
jax: 0.10.0
libtpu: 0.0.40
codegen_flags: <defaults>
</compile_context>

<pallas_src>
import numpy as np
import jax
import jax.numpy as jnp
from jax.experimental import pallas as pl
from jax.experimental.pallas import tpu as pltpu


def _pos_emb_kernel(x_ref, freqs_ref, off_ref, out_ref):
    # x_ref:     [TILE_N, 1]  (VMEM)   positions for this row tile
    # freqs_ref: [1, C]       (VMEM)   [f_0..f_{C/2-1}, f_0..f_{C/2-1}]
    # off_ref:   [1, C]       (VMEM)   [0..0, -pi/2..-pi/2]
    # out_ref:   [TILE_N, C]  (VMEM)
    x = x_ref[...]                     # [TILE_N, 1]
    f = freqs_ref[...]                 # [1, C]
    off = off_ref[...]                 # [1, C]
    phase = x * f + off                # broadcast outer product -> [TILE_N, C]
    # One unmasked, lane-dense full-block store (cos half + sin half in one shot).
    out_ref[...] = jnp.cos(phase).astype(out_ref.dtype)


def positional_embedding(x, num_channels, max_positions=10000, endpoint=False,
                         out_dtype=jnp.float32, tile_n=None):
    """x: 1-D array [N] of positions. Returns [N, num_channels] of `out_dtype`.

    num_channels must be even (matches the torch module, which silently drops the
    odd channel; we guard instead of writing an undefined column).
    """
    assert num_channels % 2 == 0, "num_channels must be even"
    n = int(x.shape[0])
    half = num_channels // 2

    # --- host-side float64 tables (exact match to torch's f64 freq math) ----------
    freqs64 = np.arange(half, dtype=np.float64)
    freqs64 = freqs64 / (half - (1 if endpoint else 0))
    freqs64 = (1.0 / max_positions) ** freqs64

    # Full-width [1, C] tables: channels [0, C/2) -> cos(x*f), [C/2, C) -> sin(x*f)
    # via sin(t) = cos(t - pi/2). Enables a single lane-dense store in the kernel.
    freqs_full = np.concatenate([freqs64, freqs64]).reshape(1, num_channels)
    phase_off = np.concatenate(
        [np.zeros(half, dtype=np.float64),
         np.full(half, -np.pi / 2, dtype=np.float64)]).reshape(1, num_channels)

    freqs_full = jnp.asarray(freqs_full, dtype=jnp.float32)
    phase_off = jnp.asarray(phase_off, dtype=jnp.float32)

    # --- row tiling ----------------------------------------------------------------
    # Keep one output buffer ~<= 4 MiB so double-buffering fits comfortably under the
    # smallest scoped-VMEM default (16 MiB on v5e; 32 MiB on v6e/v7x), cap at 1024 rows
    # (per-grid-step overhead is ~0.35 us, so bigger than 512 rows is already fine).
    if tile_n is None:
        max_rows = max(8, min(1024, (4 * 1024 * 1024) // (4 * num_channels)))
        max_rows = (max_rows // 8) * 8
        if n <= max_rows:
            tile_n = max(8, ((n + 7) // 8) * 8)   # single padded tile
        else:
            tile_n = max_rows
    else:
        tile_n = max(8, ((int(tile_n) + 7) // 8) * 8)

    n_pad = int(pl.cdiv(n, tile_n)) * tile_n
    grid = (n_pad // tile_n,)

    x_col = x.astype(jnp.float32).reshape(n, 1)
    if n_pad != n:
        x_col = jnp.pad(x_col, ((0, n_pad - n), (0, 0)))  # padded rows sliced off below

    out = pl.pallas_call(
        _pos_emb_kernel,
        out_shape=jax.ShapeDtypeStruct((n_pad, num_channels), out_dtype),
        grid_spec=pltpu.PrefetchScalarGridSpec(
            num_scalar_prefetch=0,
            grid=grid,
            in_specs=[
                pl.BlockSpec((tile_n, 1), lambda i: (i, 0)),           # x rows
                pl.BlockSpec((1, num_channels), lambda i: (0, 0)),     # freqs_full
                pl.BlockSpec((1, num_channels), lambda i: (0, 0)),     # phase_off
            ],
            out_specs=pl.BlockSpec((tile_n, num_channels), lambda i: (i, 0)),
        ),
        compiler_params=pltpu.CompilerParams(
            dimension_semantics=("parallel",),   # shards row tiles across v7x's 2 TCs
        ),
        cost_estimate=pl.CostEstimate(
            flops=2 * n_pad * num_channels,                     # mul + add per element
            transcendentals=n_pad * num_channels,               # one cos per element
            bytes_accessed=4 * (n_pad + 2 * num_channels) + n_pad * num_channels * jnp.dtype(out_dtype).itemsize,
        ),
    )(x_col, freqs_full, phase_off)

    return out[:n]


def _reference(x, num_channels, max_positions=10000, endpoint=False):
    half = num_channels // 2
    freqs = np.arange(half, dtype=np.float64)
    freqs = freqs / (half - (1 if endpoint else 0))
    freqs = (1.0 / max_positions) ** freqs
    xr = np.asarray(x, dtype=np.float64)
    phase = np.outer(xr, freqs)
    return np.concatenate([np.cos(phase), np.sin(phase)], axis=1)


if __name__ == "__main__":
    key = jax.random.PRNGKey(0)

    # Case 1: the module's typical tiny use (timestep embedding for a small batch).
    # NOTE: at this size a standalone pallas_call is dominated by launch/DMA overhead;
    # in a real model this would be fused into the consuming MLP. Kept here as the spec test.
    num_channels = 32
    batch = 8
    x = jax.random.uniform(key, (batch,), dtype=jnp.float32, minval=0.0, maxval=100.0)
    out = positional_embedding(x, num_channels)
    out = jax.block_until_ready(out)
    ref = _reference(np.asarray(x), num_channels)
    assert out.shape == (batch, num_channels), out.shape
    np.testing.assert_allclose(np.asarray(out), ref, rtol=1e-4, atol=1e-4)

    # Case 2: exercise the gridded / padded multi-tile path (3 tiles of 16 rows, pad 48->40).
    key2 = jax.random.PRNGKey(1)
    n2, c2 = 40, 128
    x2 = jax.random.uniform(key2, (n2,), dtype=jnp.float32, minval=0.0, maxval=100.0)
    out2 = positional_embedding(x2, c2, tile_n=16)
    out2 = jax.block_until_ready(out2)
    ref2 = _reference(np.asarray(x2), c2)
    assert out2.shape == (n2, c2), out2.shape
    np.testing.assert_allclose(np.asarray(out2), ref2, rtol=1e-4, atol=1e-4)

    print("KERNEL_OK")
</pallas_src>

<mosaic_0001>
module attributes {stable_mosaic.version = 11 : i64} {
  func.func @_pos_emb_kernel(%arg0: i32, %arg1: memref<8x1xf32, #tpu.memory_space<vmem>>, %arg2: memref<1x32xf32, #tpu.memory_space<vmem>>, %arg3: memref<1x32xf32, #tpu.memory_space<vmem>>, %arg4: memref<8x32xf32, #tpu.memory_space<vmem>>) attributes {dimension_semantics = [#tpu.dimension_semantics<parallel>], iteration_bounds = array<i64: 1>, scalar_prefetch = 0 : i64, scratch_operands = 0 : i64, tpu.core_type = #tpu.core_type<tc>, window_params = [{transform_indices = @transform_0, window_bounds = array<i64: 8, 1>}, {pipeline_mode = #tpu.pipeline_mode<synchronous>, transform_indices = @transform_1, window_bounds = array<i64: 1, 32>}, {pipeline_mode = #tpu.pipeline_mode<synchronous>, transform_indices = @transform_2, window_bounds = array<i64: 1, 32>}, {transform_indices = @transform_3, window_bounds = array<i64: 8, 32>}]} {
    %c0 = arith.constant 0 : index
    %c0_0 = arith.constant 0 : index
    %0 = vector.load %arg1[%c0, %c0_0] : memref<8x1xf32, #tpu.memory_space<vmem>>, vector<8x1xf32>
    %c0_1 = arith.constant 0 : index
    %c0_2 = arith.constant 0 : index
    %1 = vector.load %arg2[%c0_1, %c0_2] : memref<1x32xf32, #tpu.memory_space<vmem>>, vector<1x32xf32>
    %c0_3 = arith.constant 0 : index
    %c0_4 = arith.constant 0 : index
    %2 = vector.load %arg3[%c0_3, %c0_4] : memref<1x32xf32, #tpu.memory_space<vmem>>, vector<1x32xf32>
    %3 = vector.broadcast %0 : vector<8x1xf32> to vector<8x32xf32>
    %4 = vector.broadcast %1 : vector<1x32xf32> to vector<8x32xf32>
    %5 = arith.mulf %3, %4 : vector<8x32xf32>
    %6 = vector.broadcast %2 : vector<1x32xf32> to vector<8x32xf32>
    %7 = arith.addf %5, %6 : vector<8x32xf32>
    %8 = math.cos %7 : vector<8x32xf32>
    %c0_5 = arith.constant 0 : index
    %c0_6 = arith.constant 0 : index
    %9 = vector.load %arg4[%c0_5, %c0_6] : memref<8x32xf32, #tpu.memory_space<vmem>>, vector<8x32xf32>
    tpu.vector_store %arg4[%c0_5, %c0_6], %8 {strides = array<i32>} : memref<8x32xf32, #tpu.memory_space<vmem>>, vector<8x32xf32>,
    return
  }
  func.func @transform_0(%arg0: i32) -> (i32, i32) {
    %c0_i32 = arith.constant 0 : i32
    %c0_i32_0 = arith.constant 0 : i32
    return %arg0, %c0_i32 : i32, i32
  }
  func.func @transform_1(%arg0: i32) -> (i32, i32) {
    %c0_i32 = arith.constant 0 : i32
    %c0_i32_0 = arith.constant 0 : i32
    %c0_i32_1 = arith.constant 0 : i32
    return %c0_i32, %c0_i32_0 : i32, i32
  }
  func.func @transform_2(%arg0: i32) -> (i32, i32) {
    %c0_i32 = arith.constant 0 : i32
    %c0_i32_0 = arith.constant 0 : i32
    %c0_i32_1 = arith.constant 0 : i32
    return %c0_i32, %c0_i32_0 : i32, i32
  }
  func.func @transform_3(%arg0: i32) -> (i32, i32) {
    %c0_i32 = arith.constant 0 : i32
    %c0_i32_0 = arith.constant 0 : i32
    return %arg0, %c0_i32 : i32, i32
  }
}

</mosaic_0001>

<llo_original>
// kernel: tpu_custom_call.1
$region0: #{tpu_custom_call.1}
  #allocation0 [shape = 'u32[]', space=smem, size = 0x4, offset = 0x4, fixed_abs, tag = 'smem constant byte address 0x4 - core index']
  #allocation1 [shape = 'u32[144,128]{1,0:T(1,128)}', space=vmem, size = 0x12000, scoped, tag = 'internal scratch']
  %s0 = inlined_call_operand.vmem [shape: f32[8,1], index: 0, kind: input, shape index: {}]
  %s1 = inlined_call_operand.vmem [shape: f32[1,32], index: 1, kind: input, shape index: {}]
  %s2 = inlined_call_operand.vmem [shape: f32[1,32], index: 2, kind: input, shape index: {}]
  %s3 = inlined_call_operand.hbm [shape: f32[8,32], index: 3, kind: output, shape index: {}]
  %s4 = sld [smem:[#allocation0]]
  $region22: #{tpu_custom_call.1} parent=0
    _
  %s6 = ssub.s32 1, %s4
  %s7 = scalar_select 0, %s6, %s4
  $region1: #{tpu_custom_call.1} parent=0
    #allocation2 [shape = 'u8[4096]{0}', space=vmem, size = 0x1000, scoped, tag = 'output window, operand 0, single buffered']
    #allocation3 [shape = 's32[1]{0}', space=sflag, size = 0x4, scoped, tag = 'scoped memory for tpu_custom_call.1']
    %8 = vsyncpa [#allocation3], 0
    // Predicated region
    $region2: #{tpu_custom_call.1} parent=1 // pred_check
      _
    $region3: #{tpu_custom_call.1} parent=1 // pred_check_branch
      %10 = sbr.rel (0) target = $region5
    $region4: #{tpu_custom_call.1} parent=1 // pred_region
      _
    $region5: #{tpu_custom_call.1} parent=1 // pred_fallthru
      _
    // Predicated region
    $region6: #{tpu_custom_call.1} parent=1 // pred_check
      _
    $region7: #{tpu_custom_call.1} parent=1 // pred_check_branch
      %12 = sbr.rel (0) target = $region9
    $region8: #{tpu_custom_call.1} parent=1 // pred_region
      _
    $region9: #{tpu_custom_call.1} parent=1 // pred_fallthru
      _
    // Predicated region
    $region10: #{tpu_custom_call.1} parent=1 // pred_check
      _
    $region11: #{tpu_custom_call.1} parent=1 // pred_check_branch
      %14 = sbr.rel (0) target = $region13
    $region12: #{tpu_custom_call.1} parent=1 // pred_region
      _
    $region13: #{tpu_custom_call.1} parent=1 // pred_fallthru
      _
    %v15 = vld [vmem:[%s0] sm:$0xff]
    %v16 = vld [vmem:[%s1] sm:$0x1]
    %v17 = vld [vmem:[%s2] sm:$0x1]
    %19 = vset.pattern.permute.xlu0 0
    %20 = vperm.xlu0 %19, %v15
    %v21 = vpop.permute.xlu0 %20
    %v24 = vlaneseq
    %v25 = vshrl.u32 %v24, 7
    %v26 = vsub.s32 0, %v25
    %v27 = vrot.slane %v16, %v26
    %v29 = vmul.f32 %v21, %v27
    %v31 = vlaneseq
    %v32 = vshrl.u32 %v31, 7
    %v33 = vsub.s32 0, %v32
    %v34 = vrot.slane %v17, %v33
    %v36 = vadd.f32 %v29, %v34
    %v37 = vand.u32 2147483647, %v36
    %vm38 = vcmp.le.f32.partialorder %v37, 0.7853982
    %vm39 = vcmp.lt.s32.totalorder %v36, 0
    %v40 = vand.u32 %v36, 2139095040
    %v41 = vshrl.u32 %v40, 23
    %v42 = vsub.s32 %v41, 127
    %v43 = vand.u32 2147483647, %v36
    %v44 = vand.u32 %v43, 8388607
    %v45 = vor.u32 %v44, 8388608
    %v46 = vsub.s32 0, %v45
    %v47 = vadd.s32 %v42, 1
    %vm48 = vcmp.gt.s32.totalorder %v47, 0
    %v49 = vsel %vm48, %v47, 0
    %v50 = vshrl.u32 %v49, 5
    %v51 = vand.u32 %v49, 31
    %v52 = vsub.s32 32, %v51
    %v53 = vshrl.u32 683565275, %v52
    %v54 = vshll.u32 683565275, %v51
    %v55 = vshrl.u32 2475754826, %v52
    %v56 = vor.u32 %v54, %v55
    %v57 = vshll.u32 2475754826, %v51
    %v58 = vshrl.u32 2131351028, %v52
    %v59 = vor.u32 %v57, %v58
    %v60 = vshll.u32 2131351028, %v51
    %v61 = vshrl.u32 2102212464, %v52
    %v62 = vor.u32 %v60, %v61
    %v63 = vshll.u32 2102212464, %v51
    %v64 = vshrl.u32 920167782, %v52
    %v65 = vor.u32 %v63, %v64
    %v66 = vshll.u32 920167782, %v51
    %v67 = vshrl.u32 1326507024, %v52
    %v68 = vor.u32 %v66, %v67
    %vm69 = vcmp.lt.s32.totalorder %v50, 1
    %vm70 = vcmp.lt.s32.totalorder %v50, 2
    %vm71 = vcmp.lt.s32.totalorder %v50, 3
    %vm72 = vcmp.lt.s32.totalorder %v50, 4
    %v73 = vsel %vm69, %v53, %v56
    %v74 = vsel %vm72, %v62, 2102212464
    %v75 = vsel %vm71, %v59, %v74
    %v76 = vsel %vm70, %v73, %v75
    %v77 = vsel %vm69, %v56, %v59
    %v78 = vsel %vm72, %v65, 920167782
    %v79 = vsel %vm71, %v62, %v78
    %v80 = vsel %vm70, %v77, %v79
    %v81 = vsel %vm69, %v59, %v62
    %v82 = vsel %vm72, %v68, 1326507024
    %v83 = vsel %vm71, %v65, %v82
    %v84 = vsel %vm70, %v81, %v83
    %v85 = vshll.u32 %v45, 8
    %v86 = vmul.u32.u64.compose %v85, %v84
    %v87 = vextract.low.u32 %v86
    %v88 = vextract.high.u32 %v86
    %v89 = vmul.u32.u64.compose %v85, %v80
    %v90 = vextract.low.u32 %v89
    %v91 = vextract.high.u32 %v89
    %v92 = vmul.u32 %v85, %v76
    %v93 = vadd.s32 %v88, %v90
    %vm94 = vc.u32 %v88, %v90
    %v95 = vadd.s32 %v91, 1
    %v96 = vsel %vm94, %v95, %v91
    %v97 = vadd.s32 %v92, %v96
    %v98 = vadd.s32 %v97, 536870912
    %v99 = vshrl.u32 %v98, 30
    %v100 = vshll.u32 %v99, 30
    %v101 = vsub.s32 %v97, %v100
    %vm102 = vcmp.lt.s32.totalorder %v101, 0
    %v103 = vsub.s32 0, %v101
    %v104 = vsel %vm102, %v103, %v101
    %v105 = vclz %v104
    %v106 = vsub.s32 %v105, 2
    %vm107 = vcmp.gt.s32.totalorder 0, %v106
    %v108 = vsel %vm107, 0, %v106
    %v109 = vsub.s32 32, %v108
    %v110 = vshll.u32 %v101, %v108
    %v111 = vshrl.u32 %v93, %v109
    %v112 = vor.u32 %v110, %v111
    %v113 = vsub.s32 4294967266, %v108
    %v114 = vadd.s32 %v113, 127
    %v115 = vshll.u32 %v114, 23
    %v116 = vor.u32 4788187, %v115
    %v117 = vand.u32 2147483647, %v116
    %v119 = vcvt.s32.f32 %v112
    %v120 = vmul.f32 %v119, %v117
    %v121 = vxor.u32 %v120, 2147483648
    %v122 = vsel %vm39, %v121, %v120
    %v123 = vsub.s32 4, %v99
    %v124 = vsel %vm39, %v123, %v99
    %v125 = vsel %vm38, %v36, %v122
    %v126 = vsel %vm38, 0, %v124
    %v127 = vcosq.f32.pop %v125
    %v128 = vsinq.f32.pop %v125
    %vm129 = vweird.f32 %v36
    %v130 = vand.u32 %v126, 3
    %vm131 = vcmp.lt.s32.totalorder %v130, 2
    %vm132 = vcmp.eq.s32.totalorder %v130, 0
    %v133 = vxor.u32 %v128, 2147483648
    %v134 = vsel %vm132, %v127, %v133
    %vm135 = vcmp.eq.s32.totalorder %v130, 2
    %v136 = vxor.u32 %v127, 2147483648
    %v137 = vsel %vm135, %v136, %v128
    %v138 = vsel %vm131, %v134, %v137
    %v139 = vsel %vm129, nan, %v138
    %vm140 = vcmask 261120
    %141 = vst.msk [vmem:[#allocation2] sm:$0xff] %vm140, %v139
    // Predicated region
    $region14: #{tpu_custom_call.1} parent=1 // pred_check
      _
    $region15: #{tpu_custom_call.1} parent=1 // pred_check_branch
      %143 = sbr.rel (0) target = $region17
    $region16: #{tpu_custom_call.1} parent=1 // pred_region
      %s145 = ssub.s32 128, 128
      %146 = vsyncadd [#allocation3], %s145
      %s148 = sshll.u32 [#allocation2], 4
      %s149 = int_to_ptr.vmem [resolvable:$true] %s148
      %151 = dma.vmem_to_hbm [thread:$0]  %s149, 128, %s3, [#allocation3]
    $region17: #{tpu_custom_call.1} parent=1 // pred_fallthru
      _
    // Predicated region
    $region18: #{tpu_custom_call.1} parent=1 // pred_check
      _
    $region19: #{tpu_custom_call.1} parent=1 // pred_check_branch
      %153 = sbr.rel (0) target = $region21
    $region20: #{tpu_custom_call.1} parent=1 // pred_region
      %154 = dma.done [#allocation3], 128
    $region21: #{tpu_custom_call.1} parent=1 // pred_fallthru
      _
    %155 = vsyncpa [#allocation3], 1

</llo_original>
